<compile_context>
chip_gen: v5e
topology: v5e:2x2
jax: 0.10.0
libtpu: 0.0.40
codegen_flags: <defaults>
</compile_context>

<pallas_src>
import math

import jax
import jax.numpy as jnp
from jax.experimental import pallas as pl
from jax.experimental.pallas import tpu as pltpu


def _squeeze_copy_kernel(a_hbm, o_hbm, sem):
    # Single direct HBM->HBM DMA of the (already metadata-squeezed) slab.
    cp = pltpu.make_async_copy(a_hbm, o_hbm, sem)
    cp.start()
    cp.wait()


def squeeze_dim4(a: jax.Array) -> jax.Array:
    """torch.squeeze(a, 4) for a of shape [B, 1, 384, N, 1]."""
    assert a.ndim == 5 and a.shape[4] == 1, a.shape
    assert a.shape[1] == 1 and a.shape[2] == 384, a.shape

    out_shape = a.shape[:4]  # squeeze away the trailing size-1 dim

    # Metadata-only squeeze + flatten to a lane-dense slab with a STATIC
    # 128-wide last dim (total is always a multiple of 128 since 384 = 3*128),
    # independent of the dynamic B and N.
    total = math.prod(out_shape)
    assert total % 128 == 0, out_shape
    rows = total // 128
    a2d = jnp.reshape(a, (rows, 128))

    nbytes = total * a.dtype.itemsize
    copied = pl.pallas_call(
        _squeeze_copy_kernel,
        out_shape=jax.ShapeDtypeStruct((rows, 128), a.dtype),
        # Raw HBM refs -> no VMEM staging, no auto-pipelined vreg copy.
        in_specs=[pl.BlockSpec(memory_space=pl.ANY)],
        out_specs=pl.BlockSpec(memory_space=pl.ANY),
        scratch_shapes=[pltpu.SemaphoreType.DMA(())],
        # True cost of the emitted copy: nbytes read + nbytes written.
        cost_estimate=pl.CostEstimate(
            flops=0, transcendentals=0, bytes_accessed=2 * nbytes),
    )(a2d)

    # Metadata-only reshape back to the torch.squeeze(a, 4) shape.
    return jnp.reshape(copied, out_shape)


if __name__ == "__main__":
    key = jax.random.PRNGKey(0)
    # Dynamic dims picked small: B=2, N=128.
    B, N = 2, 128
    in_shape = (B, 1, 384, N, 1)
    a = jax.random.normal(key, in_shape, dtype=jnp.float32)

    # Reference (== torch.squeeze(a, 4)).
    expected = jnp.squeeze(a, axis=4)

    out = squeeze_dim4(a)
    out = jax.block_until_ready(out)

    assert out.shape == (B, 1, 384, N), f"got {out.shape}"
    assert out.dtype == jnp.float32
    assert jnp.array_equal(out, expected), "kernel output mismatch"

    print("KERNEL_OK")
</pallas_src>

<mosaic_0001>
module attributes {stable_mosaic.version = 11 : i64} {
  func.func @_squeeze_copy_kernel(%arg0: memref<768x128xf32, #tpu.memory_space<any>>, %arg1: memref<768x128xf32, #tpu.memory_space<any>>, %arg2: memref<!tpu.dma_semaphore, #tpu.memory_space<semaphore_mem>>) attributes {dimension_semantics = [], scalar_prefetch = 0 : i64, scratch_operands = 1 : i64, tpu.core_type = #tpu.core_type<tc>} {
    tpu.enqueue_dma source(%arg0 : memref<768x128xf32, #tpu.memory_space<any>>) target(%arg1 : memref<768x128xf32, #tpu.memory_space<any>>) target_semaphore(%arg2 : memref<!tpu.dma_semaphore, #tpu.memory_space<semaphore_mem>>)
    tpu.wait_dma2 semaphore(%arg2 : memref<!tpu.dma_semaphore, #tpu.memory_space<semaphore_mem>>) src(%arg0 : memref<768x128xf32, #tpu.memory_space<any>>) dst(%arg1 : memref<768x128xf32, #tpu.memory_space<any>>)
    return
  }
}

</mosaic_0001>

<llo_original>
// kernel: tpu_custom_call.1
$region0: #{tpu_custom_call.1}
  #allocation0 [shape = 'u32[]', space=smem, size = 0x4, offset = 0x4, fixed_abs, tag = 'smem constant byte address 0x4 - core index']
  #allocation1 [shape = 'u32[72,128]{1,0:T(1,128)}', space=vmem, size = 0x9000, scoped, tag = 'internal scratch']
  #allocation2 [shape = 's32[1]{0}', space=sflag, size = 0x4, scoped, tag = 'scratch operand']
  #allocation3 [shape = 's32[]', space=sflag, size = 0x4, offset = 0, fixed_abs, tag = 'sflag constant byte address 0x0 - dummy sync flag']
  #allocation4 [shape = 'u32[0]{0}', space=smem, size = 0, offset = 0, fixed_abs, tag = 'smem constant byte address 0x0 - null']
  %s0 = inlined_call_operand.hbm [shape: f32[768,128], index: 0, kind: input, shape index: {}]
  %s1 = inlined_call_operand.hbm [shape: f32[768,128], index: 1, kind: output, shape index: {}]
  %s2 = sld [smem:[#allocation0]]
  $region2: #{tpu_custom_call.1} parent=0
    _
  %s4 = ssub.s32 1, %s2
  %s5 = scalar_select 0, %s4, %s2
  %s7 = sshll.u32 1, 14
  %s8 = sxor.u32 4294967295, %s7
  %s10 = sshll.u32 %s0, 4
  %s11 = int_to_ptr.hbm [resolvable:$true] %s10
  %s12 = sshll.u32 %s1, 4
  %s13 = int_to_ptr.hbm [resolvable:$true] %s12
  %16 = dma.general %s11, 12288, %s13, [#allocation2], [#allocation3], [#allocation4], 0, 0
  %s17 = smul.u32 768, 1
  %s18 = sshll.u32 %s17, 4
  %19 = dma.done [#allocation2], %s18
  %20 = vsyncmov [#allocation2]
  %s21 = vpop.sfrf %20
  %p22 = scmp.eq.s32.totalorder %s21, 0
  %p23 = pneg %p22
  %25 = shalt.err (%p23)

</llo_original>
